<compile_context>
chip_gen: v5e
topology: v5e:2x2
jax: 0.10.0
libtpu: 0.0.40
codegen_flags: <defaults>
</compile_context>

<pallas_src>
import functools

import jax
import jax.numpy as jnp
from jax.experimental import pallas as pl
from jax.experimental.pallas import tpu as pltpu


def _swish_kernel(x_ref, o_ref, *, beta):
    # beta is baked in as a compile-time constant; x_ref / o_ref are VMEM tiles.
    xf = x_ref[...].astype(jnp.float32)
    o_ref[...] = (xf * jax.nn.sigmoid(beta * xf)).astype(o_ref.dtype)


def _choose_layout(n, itemsize):
    """Pick a lane-dense 2-D (rows, W) view of the flat array.

    Prefers the widest lane dim in {1024, 512, 256, 128} that divides n so no
    padding copy is needed; pads only when none divides (ragged fallback).
    """
    sub = max(8, 32 // itemsize)  # sublane multiple: 8 (f32) / 16 (bf16) / 32 (int8)
    for w in (1024, 512, 256, 128):
        if n % w == 0:
            return w, n // w, 0
    w = 512
    unit = sub * w
    pad = (-n) % unit
    return w, (n + pad) // w, pad


def swish(x: jax.Array, beta: float, *, target_tile_bytes: int = 2 << 20) -> jax.Array:
    """Elementwise swish: x * sigmoid(beta * x). Matches PyTorch Swish.forward."""
    orig_shape = x.shape
    orig_dtype = x.dtype
    n = x.size
    itemsize = jnp.dtype(orig_dtype).itemsize
    sub = max(8, 32 // itemsize)

    w, rows, pad = _choose_layout(n, itemsize)

    x_flat = x.reshape(-1)
    if pad:
        # Rare path (n not a multiple of 128): one padding pass; swish(0) == 0
        # and the tail is sliced off, so values are unaffected.
        x_flat = jnp.pad(x_flat, (0, pad))
    x2d = x_flat.reshape(rows, w)

    # ~2 MiB input tile, sublane-aligned. Small arrays get one full-extent block
    # (block == full array dims is always a legal layout).
    tr = max(sub, (target_tile_bytes // (w * itemsize)) // sub * sub)
    if rows <= tr:
        tr = rows
        grid_rows = 1
    else:
        grid_rows = pl.cdiv(rows, tr)  # partial last block handled by Pallas

    kernel = functools.partial(_swish_kernel, beta=float(beta))

    out2d = pl.pallas_call(
        kernel,
        out_shape=jax.ShapeDtypeStruct((rows, w), orig_dtype),
        grid=(grid_rows,),
        in_specs=[pl.BlockSpec((tr, w), lambda i: (i, 0))],
        out_specs=pl.BlockSpec((tr, w), lambda i: (i, 0)),
        compiler_params=pltpu.CompilerParams(
            dimension_semantics=("parallel",),  # lets v7x shard the grid over both TCs
        ),
        cost_estimate=pl.CostEstimate(
            flops=4 * n,
            transcendentals=n,
            bytes_accessed=2 * (n + pad) * itemsize,
        ),
    )(x2d)

    out_flat = out2d.reshape(-1)
    if pad:
        out_flat = out_flat[:n]
    return out_flat.reshape(orig_shape)


if __name__ == "__main__":
    key = jax.random.PRNGKey(0)
    x = jax.random.normal(key, (2, 4, 16, 16), dtype=jnp.float32)  # NCHW
    beta = 1.5  # deterministic module parameter

    out = swish(x, beta)
    jax.block_until_ready(out)

    # Pure-JAX reference check
    ref = x * jax.nn.sigmoid(beta * x)
    assert out.shape == x.shape and out.dtype == x.dtype
    assert jnp.allclose(out, ref, atol=1e-6, rtol=1e-6), "mismatch vs reference"

    print("KERNEL_OK")
</pallas_src>

<mosaic_0001>
module attributes {stable_mosaic.version = 11 : i64} {
  func.func @_swish_kernel(%arg0: i32, %arg1: memref<2x1024xf32, #tpu.memory_space<vmem>>, %arg2: memref<2x1024xf32, #tpu.memory_space<vmem>>) attributes {dimension_semantics = [#tpu.dimension_semantics<parallel>], iteration_bounds = array<i64: 1>, scalar_prefetch = 0 : i64, scratch_operands = 0 : i64, tpu.core_type = #tpu.core_type<tc>, window_params = [{transform_indices = @transform_0, window_bounds = array<i64: 2, 1024>}, {transform_indices = @transform_1, window_bounds = array<i64: 2, 1024>}]} {
    %c0 = arith.constant 0 : index
    %c0_0 = arith.constant 0 : index
    %0 = vector.load %arg1[%c0, %c0_0] : memref<2x1024xf32, #tpu.memory_space<vmem>>, vector<2x1024xf32>
    %cst = arith.constant 1.500000e+00 : f32
    %1 = vector.broadcast %cst : f32 to vector<2x1024xf32>
    %2 = arith.mulf %1, %0 : vector<2x1024xf32>
    %3 = arith.negf %2 : vector<2x1024xf32>
    %4 = math.exp %3 : vector<2x1024xf32>
    %cst_1 = arith.constant 1.000000e+00 : f32
    %5 = vector.broadcast %cst_1 : f32 to vector<2x1024xf32>
    %6 = arith.addf %5, %4 : vector<2x1024xf32>
    %7 = arith.divf %5, %6 : vector<2x1024xf32>
    %8 = arith.mulf %0, %7 : vector<2x1024xf32>
    %c0_2 = arith.constant 0 : index
    %c0_3 = arith.constant 0 : index
    %9 = vector.load %arg2[%c0_2, %c0_3] : memref<2x1024xf32, #tpu.memory_space<vmem>>, vector<2x1024xf32>
    tpu.vector_store %arg2[%c0_2, %c0_3], %8 {strides = array<i32>} : memref<2x1024xf32, #tpu.memory_space<vmem>>, vector<2x1024xf32>,
    return
  }
  func.func @transform_0(%arg0: i32) -> (i32, i32) {
    %c0_i32 = arith.constant 0 : i32
    %c0_i32_0 = arith.constant 0 : i32
    return %arg0, %c0_i32 : i32, i32
  }
  func.func @transform_1(%arg0: i32) -> (i32, i32) {
    %c0_i32 = arith.constant 0 : i32
    %c0_i32_0 = arith.constant 0 : i32
    return %arg0, %c0_i32 : i32, i32
  }
}

</mosaic_0001>

<llo_original>
// kernel: tpu_custom_call.1
$region0: #{tpu_custom_call.1}
  #allocation0 [shape = 'u32[]', space=smem, size = 0x4, offset = 0x4, fixed_abs, tag = 'smem constant byte address 0x4 - core index']
  #allocation1 [shape = 'u32[72,128]{1,0:T(1,128)}', space=vmem, size = 0x9000, scoped, tag = 'internal scratch']
  %s0 = inlined_call_operand.hbm [shape: f32[2,1024], index: 0, kind: input, shape index: {}]
  %s1 = inlined_call_operand.hbm [shape: f32[2,1024], index: 1, kind: output, shape index: {}]
  %s2 = sld [smem:[#allocation0]]
  $region18: #{tpu_custom_call.1} parent=0
    _
  %s4 = ssub.s32 1, %s2
  %s5 = scalar_select 0, %s4, %s2
  $region1: #{tpu_custom_call.1} parent=0
    #allocation2 [shape = 'u8[8192]{0}', space=vmem, size = 0x2000, scoped, tag = 'input window, operand 0, single buffered']
    #allocation3 [shape = 's32[1]{0}', space=sflag, size = 0x4, scoped, tag = 'scoped memory for tpu_custom_call.1']
    #allocation4 [shape = 's32[1]{0}', space=sflag, size = 0x4, scoped, tag = 'scoped memory for tpu_custom_call.1']
    #allocation5 [shape = 'u8[8192]{0}', space=vmem, size = 0x2000, scoped, tag = 'output window, operand 0, single buffered']
    %6 = vsyncpa [#allocation3], 0
    %7 = vsyncpa [#allocation4], 0
    // Predicated region
    $region2: #{tpu_custom_call.1} parent=1 // pred_check
      _
    $region3: #{tpu_custom_call.1} parent=1 // pred_check_branch
      %9 = sbr.rel (0) target = $region5
    $region4: #{tpu_custom_call.1} parent=1 // pred_region
      %11 = vsyncadd [#allocation3], 0
      %s13 = sshll.u32 %s0, 4
      %s14 = int_to_ptr.hbm [resolvable:$true] %s13
      %s15 = sshll.u32 [#allocation2], 4
      %s16 = int_to_ptr.vmem [resolvable:$true] %s15
      %18 = dma.hbm_to_vmem [thread:$0]  %s14, 256, %s16, [#allocation3]
    $region5: #{tpu_custom_call.1} parent=1 // pred_fallthru
      _
    // Predicated region
    $region6: #{tpu_custom_call.1} parent=1 // pred_check
      _
    $region7: #{tpu_custom_call.1} parent=1 // pred_check_branch
      %20 = sbr.rel (0) target = $region9
    $region8: #{tpu_custom_call.1} parent=1 // pred_region
      %22 = dma.done [#allocation3], 256
    $region9: #{tpu_custom_call.1} parent=1 // pred_fallthru
      _
    %v23 = vld [vmem:[#allocation2] sm:$0xff]
    %v24 = vld [vmem:[#allocation2 + $0x8] sm:$0xff]
    %v25 = vmul.f32 %v23, 1.5
    %v26 = vmul.f32 %v24, 1.5
    %v27 = vxor.u32 %v25, 2147483648
    %v28 = vxor.u32 %v26, 2147483648
    %v29 = vmul.f32 %v27, 1.442695
    %v30 = vpow.pop %v29
    %v31 = vmul.f32 %v28, 1.442695
    %v32 = vpow.pop %v31
    %v33 = vadd.f32 %v30, 1.0
    %v34 = vadd.f32 %v32, 1.0
    %v35 = vrcp.pop %v33
    %v36 = vmul.f32 %v33, %v35
    %v37 = vsub.f32 1.0, %v36
    %v38 = vmul.f32 %v35, %v37
    %v39 = vadd.f32 %v35, %v38
    %vm40 = vweird.f32 %v33
    %vm41 = vweird.f32 %v35
    %vm42 = vmor %vm40, %vm41
    %v43 = vsel %vm42, %v35, %v39
    %v44 = vand.u32 2147483647, %v33
    %vm45 = vcmp.eq.f32.partialorder %v44, 8.507059e+37
    %v46 = vand.u32 %v33, 2147483648
    %v47 = vor.u32 1.1754944e-38, %v46
    %v48 = vsel %vm45, %v47, %v43
    %v49 = vmul.f32 1.0, %v48
    %v50 = vrcp.pop %v34
    %v51 = vmul.f32 %v34, %v50
    %v52 = vsub.f32 1.0, %v51
    %v53 = vmul.f32 %v50, %v52
    %v54 = vadd.f32 %v50, %v53
    %vm55 = vweird.f32 %v34
    %vm56 = vweird.f32 %v50
    %vm57 = vmor %vm55, %vm56
    %v58 = vsel %vm57, %v50, %v54
    %v59 = vand.u32 2147483647, %v34
    %vm60 = vcmp.eq.f32.partialorder %v59, 8.507059e+37
    %v61 = vand.u32 %v34, 2147483648
    %v62 = vor.u32 1.1754944e-38, %v61
    %v63 = vsel %vm60, %v62, %v58
    %v64 = vmul.f32 1.0, %v63
    %v65 = vmul.f32 %v23, %v49
    %v66 = vmul.f32 %v24, %v64
    %67 = vst [vmem:[#allocation5] sm:$0xff] %v65
    %68 = vst [vmem:[#allocation5 + $0x8] sm:$0xff] %v66
    // Predicated region
    $region10: #{tpu_custom_call.1} parent=1 // pred_check
      _
    $region11: #{tpu_custom_call.1} parent=1 // pred_check_branch
      %70 = sbr.rel (0) target = $region13
    $region12: #{tpu_custom_call.1} parent=1 // pred_region
      %72 = vsyncadd [#allocation4], 0
      %s74 = sshll.u32 [#allocation5], 4
      %s75 = int_to_ptr.vmem [resolvable:$true] %s74
      %s76 = sshll.u32 %s1, 4
      %s77 = int_to_ptr.hbm [resolvable:$true] %s76
      %79 = dma.vmem_to_hbm [thread:$0]  %s75, 256, %s77, [#allocation4]
    $region13: #{tpu_custom_call.1} parent=1 // pred_fallthru
      _
    // Predicated region
    $region14: #{tpu_custom_call.1} parent=1 // pred_check
      _
    $region15: #{tpu_custom_call.1} parent=1 // pred_check_branch
      %81 = sbr.rel (0) target = $region17
    $region16: #{tpu_custom_call.1} parent=1 // pred_region
      %83 = dma.done [#allocation4], 256
    $region17: #{tpu_custom_call.1} parent=1 // pred_fallthru
      _
    %84 = vsyncpa [#allocation3], 1
    %85 = vsyncpa [#allocation4], 1

</llo_original>
